<compile_context>
chip_gen: v5e
topology: v5e:2x2
jax: 0.10.0
libtpu: 0.0.40
codegen_flags: <defaults>
</compile_context>

<pallas_src>
import jax
import jax.numpy as jnp
from jax.experimental import pallas as pl
from jax.experimental.pallas import tpu as pltpu

TOKEN_F = 4        # features per token (channels after GroupedTransform = fc1 in_features)
HIDDEN = 64        # fc1 out_features / LayerNorm width
OUT_F = 10         # fc3 out_features
LN_EPS = 1e-5
PE_MAX_LEN = 1000


def _sinusoidal_pe(seq_len, d_model=TOKEN_F):
    """Standard seq-first sinusoidal positional-encoding table [seq_len, d_model]."""
    pos = jnp.arange(seq_len, dtype=jnp.float32)[:, None]
    div = jnp.exp(jnp.arange(0, d_model, 2, dtype=jnp.float32)
                  * (-jnp.log(jnp.float32(10000.0)) / d_model))
    pe = jnp.zeros((seq_len, d_model), jnp.float32)
    pe = pe.at[:, 0::2].set(jnp.sin(pos * div))
    pe = pe.at[:, 1::2].set(jnp.cos(pos * div))
    return pe


def _epilogue_kernel(part_ref, corr_ref, g_ref, be_ref, w3_ref, b3_ref, o_ref):
    """Combine per-core partial seq-sums, LayerNorm(64), fc3(64->10).  Runs once (no grid)."""
    # part_ref: [ncs, 64, B]   (hidden on sublanes, batch on lanes)
    hs = jnp.sum(part_ref[...], axis=0) - corr_ref[...]            # [64, B] minus pad correction
    mu = jnp.mean(hs, axis=0, keepdims=True)                       # [1, B]   (sublane reduce)
    var = jnp.mean((hs - mu) * (hs - mu), axis=0, keepdims=True)
    hn = (hs - mu) * jax.lax.rsqrt(var + LN_EPS)
    hn = hn * g_ref[...] + be_ref[...]                             # LayerNorm(64) affine
    # TODO(synk): AnyF2([1,64],20) definition unavailable; modeled as identity.
    out = jnp.dot(w3_ref[...], hn, preferred_element_type=jnp.float32) + b3_ref[...]
    o_ref[...] = out.astype(o_ref.dtype)                           # [10, B]


def anyf_mlp_forward(x_nchw, params, *, seq_tile=2048, num_core_splits=2):
    """x_nchw: [B, 4, H, W] float32.  Returns [B, 10] logits."""
    B, C, H, W = x_nchw.shape
    assert C == TOKEN_F, "GroupedTransform modeling assumes C == 4"
    assert H % 2 == 0 and W % 2 == 0

    w1, b1 = params["w1"], params["b1"]            # [64, 4], [64]   (PyTorch fc1 layout)
    g, be = params["ln_gamma"], params["ln_beta"]  # [64], [64]
    w3, b3 = params["w3"], params["b3"]            # [10, 64], [10]  (PyTorch fc3 layout)

    # ---- prologue in plain JAX: F.avg_pool2d(x, 2) + token layout (pure reshape) ------------
    # TODO(synk): the 2x2 avg-pool could be fused via a spatially tiled BlockSpec; kept in the
    # wrapper since it is a single cheap pass and the reshape below needs no transpose.
    H2, W2 = H // 2, W // 2
    xp = x_nchw.reshape(B, C, H2, 2, W2, 2).mean(axis=(3, 5))      # [B, 4, H2, W2]
    S = H2 * W2
    assert S <= PE_MAX_LEN
    x3d = xp.reshape(B, C, S)                                      # token (b, c, s) -- lane-dense

    # ---- sequence tiling: lane tiles are multiples of 128; optional 2-way core split --------
    ts = max(128, (int(seq_tile) // 128) * 128)
    ts = min(ts, ((S + 127) // 128) * 128)
    nt_total = pl.cdiv(S, ts)
    ncs = int(num_core_splits) if nt_total >= int(num_core_splits) else 1
    nt_pc = pl.cdiv(nt_total, ncs)                                 # tiles per core
    S_pad = ncs * nt_pc * ts
    n_pad = S_pad - S
    if n_pad:
        x3d = jnp.pad(x3d, ((0, 0), (0, 0), (0, n_pad)))

    # ---- fold PositionalEncoding (and b1) through fc1:  fc1(x+pe) = x@W1^T + (pe@W1^T + b1) --
    pe_w1 = jnp.pad(_sinusoidal_pe(S) @ w1.T, ((0, n_pad), (0, 0)))    # [S_pad, 64]; pad rows = 0
    bias_tab = (pe_w1 + b1[None, :]).T                                 # [64, S_pad]; pad cols = b1
    # padded columns (x = 0, bias = b1) each add gelu(b1) to the seq-sum -> exact correction
    corr = (jnp.float32(n_pad) * jax.nn.gelu(b1, approximate=True)).reshape(HIDDEN, 1)

    # ---- main kernel: per tile, fc1 on the MXU + gelu + lane-reduce into per-core partial ----
    def seq_sum_kernel(x_ref, bias_ref, w1_ref, part_ref):
        # x_ref: [B, 4, ts]; bias_ref: [64, ts]; w1_ref: [64, 4]; part_ref: [64, B] (resident)
        @pl.when(pl.program_id(1) == 0)
        def _init():
            part_ref[...] = jnp.zeros_like(part_ref)

        w1t = w1_ref[...]                                          # [64, 4]  (resident)
        bias = bias_ref[...]                                       # [64, ts] (PE + b1 folded)
        # TODO(synk): AnyF2([1,4],100) definition unavailable; modeled as identity.
        for b in range(B):                                         # static unroll (small batch)
            xb = x_ref[b]                                          # [4, ts]
            z = jnp.dot(w1t, xb, preferred_element_type=jnp.float32) + bias   # MXU fc1
            h = jax.nn.gelu(z, approximate=True)                   # [64, ts]  VPU/EUP
            # x.sum(dim=0): lane reduce over the sequence tile, accumulate per batch column.
            part_ref[:, b:b + 1] += jnp.sum(h, axis=-1, keepdims=True)

    fp32 = 4
    cost = pl.CostEstimate(
        flops=2 * B * HIDDEN * TOKEN_F * S_pad + 8 * B * HIDDEN * S_pad,
        transcendentals=B * HIDDEN * S_pad,
        bytes_accessed=fp32 * (B * TOKEN_F * S_pad + HIDDEN * S_pad
                               + HIDDEN * TOKEN_F + ncs * HIDDEN * B),
    )

    partials = pl.pallas_call(
        seq_sum_kernel,
        out_shape=jax.ShapeDtypeStruct((ncs, HIDDEN, B), jnp.float32),
        grid=(ncs, nt_pc),
        in_specs=[
            pl.BlockSpec((B, TOKEN_F, ts), lambda c, j: (0, 0, c * nt_pc + j)),  # tokens (tiled)
            pl.BlockSpec((HIDDEN, ts), lambda c, j: (0, c * nt_pc + j)),         # PE@W1+b1 table
            pl.BlockSpec((HIDDEN, TOKEN_F), lambda c, j: (0, 0)),                # W1 (resident)
        ],
        out_specs=pl.BlockSpec((None, HIDDEN, B), lambda c, j: (c, 0, 0)),       # per-core partial
        compiler_params=pltpu.CompilerParams(
            dimension_semantics=("parallel", "arbitrary"),   # core split x sequence reduction
        ),
        cost_estimate=cost,
    )(x3d, bias_tab, w1)

    # ---- tiny epilogue kernel: combine partials, LayerNorm, fc3 ------------------------------
    out_t = pl.pallas_call(
        _epilogue_kernel,
        out_shape=jax.ShapeDtypeStruct((OUT_F, B), jnp.float32),
    )(partials, corr, g.reshape(HIDDEN, 1), be.reshape(HIDDEN, 1), w3, b3.reshape(OUT_F, 1))
    return out_t.T                                                  # [B, 10]


def init_params(key):
    """Deterministic PyTorch-style init (uniform +-1/sqrt(fan_in); LN affine = ones/zeros)."""
    k1, k2, k3, k4 = jax.random.split(key, 4)
    lim1 = 1.0 / jnp.sqrt(jnp.float32(TOKEN_F))
    lim3 = 1.0 / jnp.sqrt(jnp.float32(HIDDEN))
    return {
        "w1": jax.random.uniform(k1, (HIDDEN, TOKEN_F), jnp.float32, -lim1, lim1),  # fc1.weight
        "b1": jax.random.uniform(k2, (HIDDEN,), jnp.float32, -lim1, lim1),          # fc1.bias
        "ln_gamma": jnp.ones((HIDDEN,), jnp.float32),
        "ln_beta": jnp.zeros((HIDDEN,), jnp.float32),
        "w3": jax.random.uniform(k3, (OUT_F, HIDDEN), jnp.float32, -lim3, lim3),    # fc3.weight
        "b3": jax.random.uniform(k4, (OUT_F,), jnp.float32, -lim3, lim3),           # fc3.bias
    }


def reference_forward(x_nchw, params):
    """Pure-JAX reference (same modeling of the unavailable custom modules).

    PE is folded through fc1 by linearity (an exact rewrite of gelu(fc1(x+pe))), matching the
    kernel's decomposition so the comparison is robust to TPU matmul operand rounding."""
    B, C, H, W = x_nchw.shape
    H2, W2 = H // 2, W // 2
    xp = x_nchw.reshape(B, C, H2, 2, W2, 2).mean(axis=(3, 5))
    S = H2 * W2
    x_seq = jnp.transpose(xp, (2, 3, 0, 1)).reshape(S, B, C)        # seq-first tokens [S, B, 4]
    pe_b = _sinusoidal_pe(S) @ params["w1"].T + params["b1"]        # [S, 64]
    z = jnp.einsum("sbc,hc->sbh", x_seq, params["w1"]) + pe_b[:, None, :]
    h = jax.nn.gelu(z, approximate=True)                            # [S, B, 64]
    hs = h.sum(axis=0)                                              # [B, 64]
    mu = hs.mean(axis=-1, keepdims=True)
    var = ((hs - mu) ** 2).mean(axis=-1, keepdims=True)
    hn = (hs - mu) * jax.lax.rsqrt(var + LN_EPS) * params["ln_gamma"] + params["ln_beta"]
    return hn @ params["w3"].T + params["b3"]


if __name__ == "__main__":
    key = jax.random.PRNGKey(0)
    k_x1, k_x2, k_p = jax.random.split(key, 3)
    params = init_params(k_p)

    # Main case: 16x16 -> pooled 8x8 -> S = 64 tokens (single 128-wide tile + pad correction).
    x = jax.random.normal(k_x1, (2, TOKEN_F, 16, 16), jnp.float32)
    out = jax.block_until_ready(anyf_mlp_forward(x, params))
    ref = reference_forward(x, params)
    assert out.shape == (2, OUT_F)
    assert jnp.allclose(out, ref, atol=2e-3, rtol=2e-3), "mismatch vs pure-JAX reference (small)"

    # Larger case exercising the multi-tile pipeline, the 2-way core split and pad correction.
    x2 = jax.random.normal(k_x2, (2, TOKEN_F, 60, 48), jnp.float32)   # S = 30*24 = 720 tokens
    out2 = jax.block_until_ready(anyf_mlp_forward(x2, params, seq_tile=256))
    ref2 = reference_forward(x2, params)
    assert jnp.allclose(out2, ref2, atol=2e-3, rtol=2e-3), "mismatch vs pure-JAX reference (tiled)"

    print("KERNEL_OK")
</pallas_src>

<mosaic_0001>
module attributes {stable_mosaic.version = 11 : i64} {
  func.func @seq_sum_kernel(%arg0: i32, %arg1: i32, %arg2: memref<2x4x128xf32, #tpu.memory_space<vmem>>, %arg3: memref<64x128xf32, #tpu.memory_space<vmem>>, %arg4: memref<64x4xf32, #tpu.memory_space<vmem>>, %arg5: memref<1x64x2xf32, #tpu.memory_space<vmem>>) attributes {dimension_semantics = [#tpu.dimension_semantics<parallel>, #tpu.dimension_semantics<arbitrary>], iteration_bounds = array<i64: 1, 1>, scalar_prefetch = 0 : i64, scratch_operands = 0 : i64, tpu.core_type = #tpu.core_type<tc>, window_params = [{transform_indices = @transform_0, window_bounds = array<i64: 2, 4, 128>}, {transform_indices = @transform_1, window_bounds = array<i64: 64, 128>}, {pipeline_mode = #tpu.pipeline_mode<synchronous>, transform_indices = @transform_2, window_bounds = array<i64: 64, 4>}, {transform_indices = @transform_3, window_bounds = array<i64: 1, 64, 2>}]} {
    %c0_i32 = arith.constant 0 : i32
    %0 = arith.cmpi eq, %arg1, %c0_i32 : i32
    %1 = arith.extui %0 : i1 to i32
    %c0_i32_0 = arith.constant 0 : i32
    %2 = arith.cmpi ne, %1, %c0_i32_0 : i32
    scf.if %2 {
      %cst_32 = arith.constant 0.000000e+00 : f32
      %55 = vector.broadcast %cst_32 : f32 to vector<64x2xf32>
      %c0_33 = arith.constant 0 : index
      %c0_34 = arith.constant 0 : index
      %c0_35 = arith.constant 0 : index
      %56 = vector.load %arg5[%c0_33, %c0_34, %c0_35] : memref<1x64x2xf32, #tpu.memory_space<vmem>>, vector<1x64x2xf32>
      %57 = vector.shape_cast %56 : vector<1x64x2xf32> to vector<64x2xf32>
      %58 = vector.shape_cast %55 : vector<64x2xf32> to vector<1x64x2xf32>
      tpu.vector_store %arg5[%c0_33, %c0_34, %c0_35], %58 {strides = array<i32>} : memref<1x64x2xf32, #tpu.memory_space<vmem>>, vector<1x64x2xf32>,
    } else {
    }
    %c0 = arith.constant 0 : index
    %c0_1 = arith.constant 0 : index
    %3 = vector.load %arg4[%c0, %c0_1] : memref<64x4xf32, #tpu.memory_space<vmem>>, vector<64x4xf32>
    %c0_2 = arith.constant 0 : index
    %c0_3 = arith.constant 0 : index
    %4 = vector.load %arg3[%c0_2, %c0_3] : memref<64x128xf32, #tpu.memory_space<vmem>>, vector<64x128xf32>
    %c0_4 = arith.constant 0 : index
    %c0_5 = arith.constant 0 : index
    %c0_6 = arith.constant 0 : index
    %5 = vector.load %arg2[%c0_4, %c0_5, %c0_6] : memref<2x4x128xf32, #tpu.memory_space<vmem>>, vector<1x4x128xf32>
    %6 = vector.shape_cast %5 : vector<1x4x128xf32> to vector<4x128xf32>
    %cst = arith.constant dense<0.000000e+00> : vector<64x128xf32>
    %7 = tpu.matmul %3, %6, %cst {dimension_numbers = #tpu.dot_dimension_numbers<[1], [0], [0], [1], [0, 0, 1, 1], [], []>} : vector<64x4xf32>, vector<4x128xf32>, vector<64x128xf32> -> vector<64x128xf32>
    %8 = arith.addf %7, %4 : vector<64x128xf32>
    %9 = arith.mulf %8, %8 : vector<64x128xf32>
    %10 = arith.mulf %8, %9 : vector<64x128xf32>
    %cst_7 = arith.constant 4.471500e-02 : f32
    %11 = vector.broadcast %cst_7 : f32 to vector<64x128xf32>
    %12 = arith.mulf %11, %10 : vector<64x128xf32>
    %13 = arith.addf %8, %12 : vector<64x128xf32>
    %cst_8 = arith.constant 0.797884583 : f32
    %14 = vector.broadcast %cst_8 : f32 to vector<64x128xf32>
    %15 = arith.mulf %14, %13 : vector<64x128xf32>
    %16 = math.tanh %15 : vector<64x128xf32>
    %cst_9 = arith.constant 1.000000e+00 : f32
    %17 = vector.broadcast %cst_9 : f32 to vector<64x128xf32>
    %18 = arith.addf %17, %16 : vector<64x128xf32>
    %cst_10 = arith.constant 5.000000e-01 : f32
    %19 = vector.broadcast %cst_10 : f32 to vector<64x128xf32>
    %20 = arith.mulf %19, %18 : vector<64x128xf32>
    %21 = arith.mulf %8, %20 : vector<64x128xf32>
    %c0_11 = arith.constant 0 : index
    %c0_12 = arith.constant 0 : index
    %c0_13 = arith.constant 0 : index
    %22 = vector.load %arg5[%c0_11, %c0_12, %c0_13] : memref<1x64x2xf32, #tpu.memory_space<vmem>>, vector<1x64x1xf32>
    %23 = vector.shape_cast %22 : vector<1x64x1xf32> to vector<64x1xf32>
    %cst_14 = arith.constant dense<0.000000e+00> : vector<64xf32>
    %24 = vector.multi_reduction <add>, %21, %cst_14 [1] : vector<64x128xf32> to vector<64xf32>
    %25 = vector.shape_cast %24 : vector<64xf32> to vector<64x1xf32>
    %26 = arith.addf %23, %25 : vector<64x1xf32>
    %c0_15 = arith.constant 0 : index
    %c0_16 = arith.constant 0 : index
    %c0_17 = arith.constant 0 : index
    %27 = vector.load %arg5[%c0_15, %c0_16, %c0_17] : memref<1x64x2xf32, #tpu.memory_space<vmem>>, vector<1x64x1xf32>
    %28 = vector.shape_cast %27 : vector<1x64x1xf32> to vector<64x1xf32>
    %29 = vector.shape_cast %26 : vector<64x1xf32> to vector<1x64x1xf32>
    tpu.vector_store %arg5[%c0_15, %c0_16, %c0_17], %29 {strides = array<i32>} : memref<1x64x2xf32, #tpu.memory_space<vmem>>, vector<1x64x1xf32>,
    %c1 = arith.constant 1 : index
    %c0_18 = arith.constant 0 : index
    %c0_19 = arith.constant 0 : index
    %30 = vector.load %arg2[%c1, %c0_18, %c0_19] : memref<2x4x128xf32, #tpu.memory_space<vmem>>, vector<1x4x128xf32>
    %31 = vector.shape_cast %30 : vector<1x4x128xf32> to vector<4x128xf32>
    %cst_20 = arith.constant dense<0.000000e+00> : vector<64x128xf32>
    %32 = tpu.matmul %3, %31, %cst_20 {dimension_numbers = #tpu.dot_dimension_numbers<[1], [0], [0], [1], [0, 0, 1, 1], [], []>} : vector<64x4xf32>, vector<4x128xf32>, vector<64x128xf32> -> vector<64x128xf32>
    %33 = arith.addf %32, %4 : vector<64x128xf32>
    %34 = arith.mulf %33, %33 : vector<64x128xf32>
    %35 = arith.mulf %33, %34 : vector<64x128xf32>
    %cst_21 = arith.constant 4.471500e-02 : f32
    %36 = vector.broadcast %cst_21 : f32 to vector<64x128xf32>
    %37 = arith.mulf %36, %35 : vector<64x128xf32>
    %38 = arith.addf %33, %37 : vector<64x128xf32>
    %cst_22 = arith.constant 0.797884583 : f32
    %39 = vector.broadcast %cst_22 : f32 to vector<64x128xf32>
    %40 = arith.mulf %39, %38 : vector<64x128xf32>
    %41 = math.tanh %40 : vector<64x128xf32>
    %cst_23 = arith.constant 1.000000e+00 : f32
    %42 = vector.broadcast %cst_23 : f32 to vector<64x128xf32>
    %43 = arith.addf %42, %41 : vector<64x128xf32>
    %cst_24 = arith.constant 5.000000e-01 : f32
    %44 = vector.broadcast %cst_24 : f32 to vector<64x128xf32>
    %45 = arith.mulf %44, %43 : vector<64x128xf32>
    %46 = arith.mulf %33, %45 : vector<64x128xf32>
    %c0_25 = arith.constant 0 : index
    %c0_26 = arith.constant 0 : index
    %c1_27 = arith.constant 1 : index
    %47 = vector.load %arg5[%c0_25, %c0_26, %c1_27] : memref<1x64x2xf32, #tpu.memory_space<vmem>>, vector<1x64x1xf32>
    %48 = vector.shape_cast %47 : vector<1x64x1xf32> to vector<64x1xf32>
    %cst_28 = arith.constant dense<0.000000e+00> : vector<64xf32>
    %49 = vector.multi_reduction <add>, %46, %cst_28 [1] : vector<64x128xf32> to vector<64xf32>
    %50 = vector.shape_cast %49 : vector<64xf32> to vector<64x1xf32>
    %51 = arith.addf %48, %50 : vector<64x1xf32>
    %c0_29 = arith.constant 0 : index
    %c0_30 = arith.constant 0 : index
    %c1_31 = arith.constant 1 : index
    %52 = vector.load %arg5[%c0_29, %c0_30, %c1_31] : memref<1x64x2xf32, #tpu.memory_space<vmem>>, vector<1x64x1xf32>
    %53 = vector.shape_cast %52 : vector<1x64x1xf32> to vector<64x1xf32>
    %54 = vector.shape_cast %51 : vector<64x1xf32> to vector<1x64x1xf32>
    tpu.vector_store %arg5[%c0_29, %c0_30, %c1_31], %54 {strides = array<i32>} : memref<1x64x2xf32, #tpu.memory_space<vmem>>, vector<1x64x1xf32>,
    return
  }
  func.func @transform_0(%arg0: i32, %arg1: i32) -> (i32, i32, i32) {
    %c1_i32 = arith.constant 1 : i32
    %0 = arith.muli %arg0, %c1_i32 : i32
    %1 = arith.addi %0, %arg1 : i32
    %c0_i32 = arith.constant 0 : i32
    %c0_i32_0 = arith.constant 0 : i32
    %c0_i32_1 = arith.constant 0 : i32
    return %c0_i32, %c0_i32_0, %1 : i32, i32, i32
  }
  func.func @transform_1(%arg0: i32, %arg1: i32) -> (i32, i32) {
    %c1_i32 = arith.constant 1 : i32
    %0 = arith.muli %arg0, %c1_i32 : i32
    %1 = arith.addi %0, %arg1 : i32
    %c0_i32 = arith.constant 0 : i32
    %c0_i32_0 = arith.constant 0 : i32
    return %c0_i32, %1 : i32, i32
  }
  func.func @transform_2(%arg0: i32, %arg1: i32) -> (i32, i32) {
    %c0_i32 = arith.constant 0 : i32
    %c0_i32_0 = arith.constant 0 : i32
    %c0_i32_1 = arith.constant 0 : i32
    return %c0_i32, %c0_i32_0 : i32, i32
  }
  func.func @transform_3(%arg0: i32, %arg1: i32) -> (i32, i32, i32) {
    %c0_i32 = arith.constant 0 : i32
    %c0_i32_0 = arith.constant 0 : i32
    %c0_i32_1 = arith.constant 0 : i32
    return %arg0, %c0_i32, %c0_i32_0 : i32, i32, i32
  }
}

</mosaic_0001>

<llo_original>
// kernel: tpu_custom_call.1
$region0: #{tpu_custom_call.1}
  #allocation0 [shape = 'u32[]', space=smem, size = 0x4, offset = 0x4, fixed_abs, tag = 'smem constant byte address 0x4 - core index']
  #allocation1 [shape = 'u32[72,128]{1,0:T(1,128)}', space=vmem, size = 0x9000, scoped, tag = 'internal scratch']
  %s0 = inlined_call_operand.hbm [shape: f32[2,4,128], index: 0, kind: input, shape index: {}]
  %s1 = inlined_call_operand.vmem [shape: f32[64,128], index: 1, kind: input, shape index: {}]
  %s2 = inlined_call_operand.vmem [shape: f32[64,4], index: 2, kind: input, shape index: {}]
  %s3 = inlined_call_operand.vmem [shape: f32[1,64,2], index: 3, kind: output, shape index: {}]
  %s4 = sld [smem:[#allocation0]]
  $region30: #{tpu_custom_call.1} parent=0
    _
  %s6 = ssub.s32 1, %s4
  %s7 = scalar_select 0, %s6, %s4
  $region1: #{tpu_custom_call.1} parent=0
    #allocation2 [shape = 'u8[4096]{0}', space=vmem, size = 0x1000, scoped, tag = 'input window, operand 0, single buffered']
    #allocation3 [shape = 's32[1]{0}', space=sflag, size = 0x4, scoped, tag = 'scoped memory for tpu_custom_call.1']
    %8 = vsyncpa [#allocation3], 0
    // Predicated region
    $region2: #{tpu_custom_call.1} parent=1 // pred_check
      _
    $region3: #{tpu_custom_call.1} parent=1 // pred_check_branch
      %10 = sbr.rel (0) target = $region5
    $region4: #{tpu_custom_call.1} parent=1 // pred_region
      %s11 = sadd.s32 0, 0
      %13 = vsyncadd [#allocation3], 0
      %s14 = smul.addr %s11, 4
      %s15 = scalar_lea.hbm %s0, %s14
      %s16 = sshll.u32 %s15, 4
      %s17 = int_to_ptr.hbm [resolvable:$true] %s16
      %s18 = sshll.u32 [#allocation2], 4
      %s19 = int_to_ptr.vmem [resolvable:$true] %s18
      %24 = dma.hbm_to_vmem [thread:$0]  %s17, 128, %s19, [#allocation3], 64, 64, 4
    $region5: #{tpu_custom_call.1} parent=1 // pred_fallthru
      _
    // Predicated region
    $region6: #{tpu_custom_call.1} parent=1 // pred_check
      _
    $region7: #{tpu_custom_call.1} parent=1 // pred_check_branch
      %26 = sbr.rel (0) target = $region9
    $region8: #{tpu_custom_call.1} parent=1 // pred_region
      %s27 = sadd.s32 0, 0
      %p28 = scmp.lt.s32.totalorder %s27, 0
      %s29 = scalar_select %p28, %s27, 0
      %s30 = smul.addr %s29, 8
      %s31 = scalar_lea.vmem %s1, %s30
      %s32 = sadd.s32 0, 0
    $region9: #{tpu_custom_call.1} parent=1 // pred_fallthru
      _
    // Predicated region
    $region10: #{tpu_custom_call.1} parent=1 // pred_check
      _
    $region11: #{tpu_custom_call.1} parent=1 // pred_check_branch
      %34 = sbr.rel (0) target = $region13
    $region12: #{tpu_custom_call.1} parent=1 // pred_region
      _
    $region13: #{tpu_custom_call.1} parent=1 // pred_fallthru
      _
    // Predicated region
    $region14: #{tpu_custom_call.1} parent=1 // pred_check
      _
    $region15: #{tpu_custom_call.1} parent=1 // pred_check_branch
      %36 = sbr.rel (0) target = $region17
    $region16: #{tpu_custom_call.1} parent=1 // pred_region
      %38 = dma.done [#allocation3], 128
    $region17: #{tpu_custom_call.1} parent=1 // pred_fallthru
      _
    %s39 = sadd.s32 0, 0
    %p40 = scmp.lt.s32.totalorder %s39, 0
    %s41 = scalar_select %p40, %s39, 0
    %s42 = smul.addr %s41, 8
    %s43 = scalar_lea.vmem %s1, %s42
    %s44 = sadd.s32 0, 0
    %s45 = sadd.s32 0, 0
    %p46 = scmp.lt.s32.totalorder %s45, 0
    %s47 = scalar_select %p46, %s45, 0
    %s48 = smul.addr %s47, 8
    %s49 = scalar_lea.vmem %s1, %s48
    %s50 = sadd.s32 0, 0
    %p51 = scmp.eq.s32.totalorder 0, 0
    // Predicated region
    $region18: #{tpu_custom_call.1} parent=1 // pred_check
      %p52 = pneg %p51
    $region19: #{tpu_custom_call.1} parent=1 // pred_check_branch
      %54 = sbr.rel (%p52) target = $region21
    $region20: #{tpu_custom_call.1} parent=1 // pred_region
      %vm55 = vcmask 15360
      %56 = vst.msk [vmem:[%s3] sm:$0xff] %vm55, 0.0
      %57 = vst.msk [vmem:[%s3 + $0x8] sm:$0xff] %vm55, 0.0
      %58 = vst.msk [vmem:[%s3 + $0x10] sm:$0xff] %vm55, 0.0
      %59 = vst.msk [vmem:[%s3 + $0x18] sm:$0xff] %vm55, 0.0
      %60 = vst.msk [vmem:[%s3 + $0x20] sm:$0xff] %vm55, 0.0
      %61 = vst.msk [vmem:[%s3 + $0x28] sm:$0xff] %vm55, 0.0
      %62 = vst.msk [vmem:[%s3 + $0x30] sm:$0xff] %vm55, 0.0
      %63 = vst.msk [vmem:[%s3 + $0x38] sm:$0xff] %vm55, 0.0
    $region21: #{tpu_custom_call.1} parent=1 // pred_fallthru
      _
    %v64 = vld [vmem:[%s2] sm:$0xff]
    %v65 = vld [vmem:[%s2 + $0x8] sm:$0xff]
    %v66 = vld [vmem:[%s2 + $0x10] sm:$0xff]
    %v67 = vld [vmem:[%s2 + $0x18] sm:$0xff]
    %v68 = vld [vmem:[%s2 + $0x20] sm:$0xff]
    %v69 = vld [vmem:[%s2 + $0x28] sm:$0xff]
    %v70 = vld [vmem:[%s2 + $0x30] sm:$0xff]
    %v71 = vld [vmem:[%s2 + $0x38] sm:$0xff]
    %v72 = vld [vmem:[%s49] sm:$0xff]
    %v73 = vld [vmem:[%s49 + $0x8] sm:$0xff]
    %v74 = vld [vmem:[%s49 + $0x10] sm:$0xff]
    %v75 = vld [vmem:[%s49 + $0x18] sm:$0xff]
    %v76 = vld [vmem:[%s49 + $0x20] sm:$0xff]
    %v77 = vld [vmem:[%s49 + $0x28] sm:$0xff]
    %v78 = vld [vmem:[%s49 + $0x30] sm:$0xff]
    %v79 = vld [vmem:[%s49 + $0x38] sm:$0xff]
    %v80 = vld [vmem:[#allocation2] sm:$0xf]
    %vm81 = vcmask 31744
    %v83 = vsel %vm81, %v64, 0
    %v86 = vsel %vm81, %v65, 0
    %v89 = vsel %vm81, %v66, 0
    %v92 = vsel %vm81, %v67, 0
    %v95 = vsel %vm81, %v68, 0
    %v98 = vsel %vm81, %v69, 0
    %v101 = vsel %vm81, %v70, 0
    %v104 = vsel %vm81, %v71, 0
    %vm106 = vcmask 1043456
    %v108 = vsel %vm106, %v80, 0
    %110 = vmatpush.msra.mxu0 0.0
    %111 = vmatpush.msra.mxu0 0.0
    %112 = vmatpush.msra.mxu0 0.0
    %113 = vmatpush.msra.mxu0 0.0
    %114 = vmatpush.msra.mxu0 0.0
    %115 = vmatpush.msra.mxu0 0.0
    %116 = vmatpush.msra.mxu0 0.0
    %117 = vmatpush.msra.mxu0 0.0
    %118 = vmatpush.msra.mxu0 0.0
    %119 = vmatpush.msra.mxu0 0.0
    %120 = vmatpush.msra.mxu0 0.0
    %121 = vmatpush.msra.mxu0 0.0
    %122 = vmatpush.msra.mxu0 0.0
    %123 = vmatpush.msra.mxu0 0.0
    %124 = vmatpush.msra.mxu0 0.0
    %125 = vmatpush.msra.mxu0 %v108
    %126 = vmatmul.f32.gmra.mxu0 %v83
    %v127 = vpop.f32.mrf.mxu0
    %v128 = vadd.f32 %v72, %v127
    %129 = vmatmul.f32.gmra.mxu0 %v86
    %v130 = vpop.f32.mrf.mxu0
    %v131 = vadd.f32 %v73, %v130
    %132 = vmatmul.f32.gmra.mxu0 %v89
    %v133 = vpop.f32.mrf.mxu0
    %v134 = vadd.f32 %v74, %v133
    %135 = vmatmul.f32.gmra.mxu0 %v92
    %v136 = vpop.f32.mrf.mxu0
    %v137 = vadd.f32 %v75, %v136
    %138 = vmatmul.f32.gmra.mxu0 %v95
    %v139 = vpop.f32.mrf.mxu0
    %v140 = vadd.f32 %v76, %v139
    %141 = vmatmul.f32.gmra.mxu0 %v98
    %v142 = vpop.f32.mrf.mxu0
    %v143 = vadd.f32 %v77, %v142
    %144 = vmatmul.f32.gmra.mxu0 %v101
    %v145 = vpop.f32.mrf.mxu0
    %v146 = vadd.f32 %v78, %v145
    %147 = vmatmul.f32.gmra.mxu0 %v104
    %v148 = vpop.f32.mrf.mxu0
    %v149 = vadd.f32 %v79, %v148
    %150 = vdwg.mxu0
    %v151 = vmul.f32 %v128, %v128
    %v152 = vmul.f32 %v131, %v131
    %v153 = vmul.f32 %v134, %v134
    %v154 = vmul.f32 %v137, %v137
    %v155 = vmul.f32 %v140, %v140
    %v156 = vmul.f32 %v143, %v143
    %v157 = vmul.f32 %v146, %v146
    %v158 = vmul.f32 %v149, %v149
    %v159 = vmul.f32 %v128, %v151
    %v160 = vmul.f32 %v131, %v152
    %v161 = vmul.f32 %v134, %v153
    %v162 = vmul.f32 %v137, %v154
    %v163 = vmul.f32 %v140, %v155
    %v164 = vmul.f32 %v143, %v156
    %v165 = vmul.f32 %v146, %v157
    %v166 = vmul.f32 %v149, %v158
    %v167 = vmul.f32 %v159, 0.044715
    %v168 = vmul.f32 %v160, 0.044715
    %v169 = vmul.f32 %v161, 0.044715
    %v170 = vmul.f32 %v162, 0.044715
    %v171 = vmul.f32 %v163, 0.044715
    %v172 = vmul.f32 %v164, 0.044715
    %v173 = vmul.f32 %v165, 0.044715
    %v174 = vmul.f32 %v166, 0.044715
    %v175 = vadd.f32 %v128, %v167
    %v176 = vadd.f32 %v131, %v168
    %v177 = vadd.f32 %v134, %v169
    %v178 = vadd.f32 %v137, %v170
    %v179 = vadd.f32 %v140, %v171
    %v180 = vadd.f32 %v143, %v172
    %v181 = vadd.f32 %v146, %v173
    %v182 = vadd.f32 %v149, %v174
    %v183 = vmul.f32 %v175, 0.7978846
    %v184 = vmul.f32 %v176, 0.7978846
    %v185 = vmul.f32 %v177, 0.7978846
    %v186 = vmul.f32 %v178, 0.7978846
    %v187 = vmul.f32 %v179, 0.7978846
    %v188 = vmul.f32 %v180, 0.7978846
    %v189 = vmul.f32 %v181, 0.7978846
    %v190 = vmul.f32 %v182, 0.7978846
    %v191 = vtanh.pop %v183
    %v192 = vtanh.pop %v184
    %v193 = vtanh.pop %v185
    %v194 = vtanh.pop %v186
    %v195 = vtanh.pop %v187
    %v196 = vtanh.pop %v188
    %v197 = vtanh.pop %v189
    %v198 = vtanh.pop %v190
    %v199 = vadd.f32 %v191, 1.0
    %v200 = vadd.f32 %v192, 1.0
    %v201 = vadd.f32 %v193, 1.0
    %v202 = vadd.f32 %v194, 1.0
    %v203 = vadd.f32 %v195, 1.0
    %v204 = vadd.f32 %v196, 1.0
    %v205 = vadd.f32 %v197, 1.0
    %v206 = vadd.f32 %v198, 1.0
    %v207 = vmul.f32 %v199, 0.5
    %v208 = vmul.f32 %v200, 0.5
    %v209 = vmul.f32 %v201, 0.5
    %v210 = vmul.f32 %v202, 0.5
    %v211 = vmul.f32 %v203, 0.5
    %v212 = vmul.f32 %v204, 0.5
    %v213 = vmul.f32 %v205, 0.5
    %v214 = vmul.f32 %v206, 0.5
    %v215 = vmul.f32 %v128, %v207
    %v216 = vmul.f32 %v131, %v208
    %v217 = vmul.f32 %v134, %v209
    %v218 = vmul.f32 %v137, %v210
    %v219 = vmul.f32 %v140, %v211
    %v220 = vmul.f32 %v143, %v212
    %v221 = vmul.f32 %v146, %v213
    %v222 = vmul.f32 %v149, %v214
    %v223 = vld [vmem:[%s3] sm:$0xff]
    %v224 = vld [vmem:[%s3 + $0x8] sm:$0xff]
    %v225 = vld [vmem:[%s3 + $0x10] sm:$0xff]
    %v226 = vld [vmem:[%s3 + $0x18] sm:$0xff]
    %v227 = vld [vmem:[%s3 + $0x20] sm:$0xff]
    %v228 = vld [vmem:[%s3 + $0x28] sm:$0xff]
    %v229 = vld [vmem:[%s3 + $0x30] sm:$0xff]
    %v230 = vld [vmem:[%s3 + $0x38] sm:$0xff]
    %231 = vadd.xlane.f32.xlu0 %v215
    %v232 = vpop.xlane.xlu0 %231
    %233 = vadd.xlane.f32.xlu0 %v216
    %v234 = vpop.xlane.xlu0 %233
    %235 = vadd.xlane.f32.xlu0 %v217
    %v236 = vpop.xlane.xlu0 %235
    %237 = vadd.xlane.f32.xlu0 %v218
    %v238 = vpop.xlane.xlu0 %237
    %239 = vadd.xlane.f32.xlu0 %v219
    %v240 = vpop.xlane.xlu0 %239
    %241 = vadd.xlane.f32.xlu0 %v220
    %v242 = vpop.xlane.xlu0 %241
    %243 = vadd.xlane.f32.xlu0 %v221
    %v244 = vpop.xlane.xlu0 %243
    %245 = vadd.xlane.f32.xlu0 %v222
    %v246 = vpop.xlane.xlu0 %245
    %v247 = vadd.f32 %v223, %v232
    %v248 = vadd.f32 %v224, %v234
    %v249 = vadd.f32 %v225, %v236
    %v250 = vadd.f32 %v226, %v238
    %v251 = vadd.f32 %v227, %v240
    %v252 = vadd.f32 %v228, %v242
    %v253 = vadd.f32 %v229, %v244
    %v254 = vadd.f32 %v230, %v246
    %vm255 = vcmask 7168
    %256 = vst.msk [vmem:[%s3] sm:$0xff] %vm255, %v247
    %257 = vst.msk [vmem:[%s3 + $0x8] sm:$0xff] %vm255, %v248
    %258 = vst.msk [vmem:[%s3 + $0x10] sm:$0xff] %vm255, %v249
    %259 = vst.msk [vmem:[%s3 + $0x18] sm:$0xff] %vm255, %v250
    %260 = vst.msk [vmem:[%s3 + $0x20] sm:$0xff] %vm255, %v251
    %261 = vst.msk [vmem:[%s3 + $0x28] sm:$0xff] %vm255, %v252
    %262 = vst.msk [vmem:[%s3 + $0x30] sm:$0xff] %vm255, %v253
    %263 = vst.msk [vmem:[%s3 + $0x38] sm:$0xff] %vm255, %v254
    %s264 = scalar_lea.vmem [#allocation2], 4
    %v265 = vld [vmem:[%s264] sm:$0xf]
    %v267 = vsel %vm106, %v265, 0
    %269 = vmatpush.msra.mxu0 0.0
    %270 = vmatpush.msra.mxu0 0.0
    %271 = vmatpush.msra.mxu0 0.0
    %272 = vmatpush.msra.mxu0 0.0
    %273 = vmatpush.msra.mxu0 0.0
    %274 = vmatpush.msra.mxu0 0.0
    %275 = vmatpush.msra.mxu0 0.0
    %276 = vmatpush.msra.mxu0 0.0
    %277 = vmatpush.msra.mxu0 0.0
    %278 = vmatpush.msra.mxu0 0.0
    %279 = vmatpush.msra.mxu0 0.0
    %280 = vmatpush.msra.mxu0 0.0
    %281 = vmatpush.msra.mxu0 0.0
    %282 = vmatpush.msra.mxu0 0.0
    %283 = vmatpush.msra.mxu0 0.0
    %284 = vmatpush.msra.mxu0 %v267
    %285 = vmatmul.f32.gmra.mxu0 %v83
    %v286 = vpop.f32.mrf.mxu0
    %v287 = vadd.f32 %v72, %v286
    %288 = vmatmul.f32.gmra.mxu0 %v86
    %v289 = vpop.f32.mrf.mxu0
    %v290 = vadd.f32 %v73, %v289
    %291 = vmatmul.f32.gmra.mxu0 %v89
    %v292 = vpop.f32.mrf.mxu0
    %v293 = vadd.f32 %v74, %v292
    %294 = vmatmul.f32.gmra.mxu0 %v92
    %v295 = vpop.f32.mrf.mxu0
    %v296 = vadd.f32 %v75, %v295
    %297 = vmatmul.f32.gmra.mxu0 %v95
    %v298 = vpop.f32.mrf.mxu0
    %v299 = vadd.f32 %v76, %v298
    %300 = vmatmul.f32.gmra.mxu0 %v98
    %v301 = vpop.f32.mrf.mxu0
    %v302 = vadd.f32 %v77, %v301
    %303 = vmatmul.f32.gmra.mxu0 %v101
    %v304 = vpop.f32.mrf.mxu0
    %v305 = vadd.f32 %v78, %v304
    %306 = vmatmul.f32.gmra.mxu0 %v104
    %v307 = vpop.f32.mrf.mxu0
    %v308 = vadd.f32 %v79, %v307
    %309 = vdwg.mxu0
    %v310 = vmul.f32 %v287, %v287
    %v311 = vmul.f32 %v290, %v290
    %v312 = vmul.f32 %v293, %v293
    %v313 = vmul.f32 %v296, %v296
    %v314 = vmul.f32 %v299, %v299
    %v315 = vmul.f32 %v302, %v302
    %v316 = vmul.f32 %v305, %v305
    %v317 = vmul.f32 %v308, %v308
    %v318 = vmul.f32 %v287, %v310
    %v319 = vmul.f32 %v290, %v311
    %v320 = vmul.f32 %v293, %v312
    %v321 = vmul.f32 %v296, %v313
    %v322 = vmul.f32 %v299, %v314
    %v323 = vmul.f32 %v302, %v315
    %v324 = vmul.f32 %v305, %v316
    %v325 = vmul.f32 %v308, %v317
    %v326 = vmul.f32 %v318, 0.044715
    %v327 = vmul.f32 %v319, 0.044715
    %v328 = vmul.f32 %v320, 0.044715
    %v329 = vmul.f32 %v321, 0.044715
    %v330 = vmul.f32 %v322, 0.044715
    %v331 = vmul.f32 %v323, 0.044715
    %v332 = vmul.f32 %v324, 0.044715
    %v333 = vmul.f32 %v325, 0.044715
    %v334 = vadd.f32 %v287, %v326
    %v335 = vadd.f32 %v290, %v327
    %v336 = vadd.f32 %v293, %v328
    %v337 = vadd.f32 %v296, %v329
    %v338 = vadd.f32 %v299, %v330
    %v339 = vadd.f32 %v302, %v331
    %v340 = vadd.f32 %v305, %v332
    %v341 = vadd.f32 %v308, %v333
    %v342 = vmul.f32 %v334, 0.7978846
    %v343 = vmul.f32 %v335, 0.7978846
    %v344 = vmul.f32 %v336, 0.7978846
    %v345 = vmul.f32 %v337, 0.7978846
    %v346 = vmul.f32 %v338, 0.7978846
    %v347 = vmul.f32 %v339, 0.7978846
    %v348 = vmul.f32 %v340, 0.7978846
    %v349 = vmul.f32 %v341, 0.7978846
    %v350 = vtanh.pop %v342
    %v351 = vtanh.pop %v343
    %v352 = vtanh.pop %v344
    %v353 = vtanh.pop %v345
    %v354 = vtanh.pop %v346
    %v355 = vtanh.pop %v347
    %v356 = vtanh.pop %v348
    %v357 = vtanh.pop %v349
    %v358 = vadd.f32 %v350, 1.0
    %v359 = vadd.f32 %v351, 1.0
    %v360 = vadd.f32 %v352, 1.0
    %v361 = vadd.f32 %v353, 1.0
    %v362 = vadd.f32 %v354, 1.0
    %v363 = vadd.f32 %v355, 1.0
    %v364 = vadd.f32 %v356, 1.0
    %v365 = vadd.f32 %v357, 1.0
    %v366 = vmul.f32 %v358, 0.5
    %v367 = vmul.f32 %v359, 0.5
    %v368 = vmul.f32 %v360, 0.5
    %v369 = vmul.f32 %v361, 0.5
    %v370 = vmul.f32 %v362, 0.5
    %v371 = vmul.f32 %v363, 0.5
    %v372 = vmul.f32 %v364, 0.5
    %v373 = vmul.f32 %v365, 0.5
    %v374 = vmul.f32 %v287, %v366
    %v375 = vmul.f32 %v290, %v367
    %v376 = vmul.f32 %v293, %v368
    %v377 = vmul.f32 %v296, %v369
    %v378 = vmul.f32 %v299, %v370
    %v379 = vmul.f32 %v302, %v371
    %v380 = vmul.f32 %v305, %v372
    %v381 = vmul.f32 %v308, %v373
    %v382 = vld [vmem:[%s3] sm:$0xff]
    %v383 = vld [vmem:[%s3 + $0x8] sm:$0xff]
    %v384 = vld [vmem:[%s3 + $0x10] sm:$0xff]
    %v385 = vld [vmem:[%s3 + $0x18] sm:$0xff]
    %v386 = vld [vmem:[%s3 + $0x20] sm:$0xff]
    %v387 = vld [vmem:[%s3 + $0x28] sm:$0xff]
    %v388 = vld [vmem:[%s3 + $0x30] sm:$0xff]
    %v389 = vld [vmem:[%s3 + $0x38] sm:$0xff]
    %390 = vadd.xlane.f32.xlu0 %v374
    %v391 = vpop.xlane.xlu0 %390
    %392 = vadd.xlane.f32.xlu0 %v375
    %v393 = vpop.xlane.xlu0 %392
    %394 = vadd.xlane.f32.xlu0 %v376
    %v395 = vpop.xlane.xlu0 %394
    %396 = vadd.xlane.f32.xlu0 %v377
    %v397 = vpop.xlane.xlu0 %396
    %398 = vadd.xlane.f32.xlu0 %v378
    %v399 = vpop.xlane.xlu0 %398
    %400 = vadd.xlane.f32.xlu0 %v379
    %v401 = vpop.xlane.xlu0 %400
    %402 = vadd.xlane.f32.xlu0 %v380
    %v403 = vpop.xlane.xlu0 %402
    %404 = vadd.xlane.f32.xlu0 %v381
    %v405 = vpop.xlane.xlu0 %404
    %v406 = vadd.f32 %v382, %v391
    %v407 = vadd.f32 %v383, %v393
    %v408 = vadd.f32 %v384, %v395
    %v409 = vadd.f32 %v385, %v397
    %v410 = vadd.f32 %v386, %v399
    %v411 = vadd.f32 %v387, %v401
    %v412 = vadd.f32 %v388, %v403
    %v413 = vadd.f32 %v389, %v405
    %vm414 = vcmask 15368
    %415 = vst.msk [vmem:[%s3] sm:$0xff] %vm414, %v406
    %416 = vst.msk [vmem:[%s3 + $0x8] sm:$0xff] %vm414, %v407
    %417 = vst.msk [vmem:[%s3 + $0x10] sm:$0xff] %vm414, %v408
    %418 = vst.msk [vmem:[%s3 + $0x18] sm:$0xff] %vm414, %v409
    %419 = vst.msk [vmem:[%s3 + $0x20] sm:$0xff] %vm414, %v410
    %420 = vst.msk [vmem:[%s3 + $0x28] sm:$0xff] %vm414, %v411
    %421 = vst.msk [vmem:[%s3 + $0x30] sm:$0xff] %vm414, %v412
    %422 = vst.msk [vmem:[%s3 + $0x38] sm:$0xff] %vm414, %v413
    // Predicated region
    $region22: #{tpu_custom_call.1} parent=1 // pred_check
      _
    $region23: #{tpu_custom_call.1} parent=1 // pred_check_branch
      %424 = sbr.rel (0) target = $region25
    $region24: #{tpu_custom_call.1} parent=1 // pred_region
      _
    $region25: #{tpu_custom_call.1} parent=1 // pred_fallthru
      _
    // Predicated region
    $region26: #{tpu_custom_call.1} parent=1 // pred_check
      _
    $region27: #{tpu_custom_call.1} parent=1 // pred_check_branch
      %426 = sbr.rel (0) target = $region29
    $region28: #{tpu_custom_call.1} parent=1 // pred_region
      _
    $region29: #{tpu_custom_call.1} parent=1 // pred_fallthru
      _
    %427 = vsyncpa [#allocation3], 1

</llo_original>
